<compile_context>
chip_gen: v5e
topology: v5e:2x2
jax: 0.10.0
libtpu: 0.0.40
codegen_flags: <defaults>
</compile_context>

<pallas_src>
import math

import jax
import jax.numpy as jnp
from jax.experimental import pallas as pl
from jax.experimental.pallas import tpu as pltpu


def _round_up(x, m):
    return ((x + m - 1) // m) * m


def time_embedding_kernel(t_ref, freq_ref, phase_ref, w0_ref, b0_ref,
                          w1_ref, b1_ref, out_ref):
    """Fused sinusoidal embedding + linear_0 + SiLU + linear_1.

    t_ref     : (TB, 1)    f32 timesteps
    freq_ref  : (1, Kp)    f32 duplicated+zero-padded frequencies
    phase_ref : (1, Kp)    f32 phase (0 for cos half, -pi/2 for sin half)
    w0_ref    : (Kp, D)    f32 zero-padded W0^T
    b0_ref    : (1, D)     f32
    w1_ref    : (D, D)     f32 W1^T
    b1_ref    : (1, D)     f32
    out_ref   : (TB, D)
    """
    t = t_ref[...]                                        # (TB, 1)
    # Lane-dense sinusoidal embedding: [cos(t*f), sin(t*f)] == cos(t*[f,f]+[0,-pi/2])
    emb = jnp.cos(t * freq_ref[...] + phase_ref[...])     # (TB, Kp)

    # linear_0 (MXU): padded rows of W0^T are zero -> padded emb cols are inert.
    h = jnp.dot(emb, w0_ref[...], preferred_element_type=jnp.float32) + b0_ref[...]

    # SiLU in f32 (VPU + EUP)
    h = h * jax.nn.sigmoid(h)

    # linear_1 (MXU)
    out = jnp.dot(h, w1_ref[...], preferred_element_type=jnp.float32) + b1_ref[...]

    out_ref[...] = out.astype(out_ref.dtype)


def prepare_time_embedding_params(model_channels, w0, b0, w1, b1):
    """One-time parameter prep (transpose, pad K to a multiple of 128, phase trick)."""
    half = model_channels // 2
    D = w1.shape[0]
    freqs = jnp.exp(-math.log(10000.0)
                    * jnp.arange(half, dtype=jnp.float32) / half)      # (half,)

    # [cos(t*f), sin(t*f)]  ==  cos(t*[f, f] + [0, -pi/2])   (column order preserved)
    freq_full = jnp.concatenate([freqs, freqs])                          # (C_model,)
    phase = jnp.concatenate(
        [jnp.zeros((half,), jnp.float32),
         jnp.full((half,), -0.5 * math.pi, jnp.float32)])                # (C_model,)

    Kp = _round_up(model_channels, 128)                                  # lane-dense K
    freq_p = jnp.zeros((1, Kp), jnp.float32).at[0, :model_channels].set(freq_full)
    phase_p = jnp.zeros((1, Kp), jnp.float32).at[0, :model_channels].set(phase)
    w0t_p = jnp.zeros((Kp, D), jnp.float32).at[:model_channels, :].set(
        w0.astype(jnp.float32).T)
    b0r = b0.astype(jnp.float32).reshape(1, D)
    w1t = w1.astype(jnp.float32).T
    b1r = b1.astype(jnp.float32).reshape(1, D)
    return freq_p, phase_p, w0t_p, b0r, w1t, b1r


def time_embedding(t, params, *, out_dtype=jnp.float32):
    """t: (B,) timesteps. params: output of prepare_time_embedding_params."""
    freq_p, phase_p, w0t_p, b0r, w1t, b1r = params
    B = t.shape[0]
    Kp = w0t_p.shape[0]
    D = w1t.shape[1]

    # Batch tile: multiple of 8 (sublane-dense); tile by 256 + parallel grid if large.
    if B > 256:
        TB = 256
    else:
        TB = _round_up(B, 8)
    Bp = _round_up(B, TB)

    t2d = t.astype(jnp.float32).reshape(B, 1)
    if Bp != B:
        t2d = jnp.pad(t2d, ((0, Bp - B), (0, 0)))

    grid = (Bp // TB,)

    cost = pl.CostEstimate(
        flops=2 * Bp * (Kp * D + D * D),
        transcendentals=Bp * (Kp + D),                       # cos + sigmoid
        bytes_accessed=4 * (Bp * 1 + 2 * Kp + Kp * D + D + D * D + D + Bp * D),
    )

    out = pl.pallas_call(
        time_embedding_kernel,
        out_shape=jax.ShapeDtypeStruct((Bp, D), out_dtype),
        grid=grid,
        in_specs=[
            pl.BlockSpec((TB, 1), lambda i: (i, 0)),          # timesteps tile
            pl.BlockSpec((1, Kp), lambda i: (0, 0)),          # freq (VMEM-resident)
            pl.BlockSpec((1, Kp), lambda i: (0, 0)),          # phase
            pl.BlockSpec((Kp, D), lambda i: (0, 0)),          # W0^T (padded)
            pl.BlockSpec((1, D), lambda i: (0, 0)),           # b0
            pl.BlockSpec((D, D), lambda i: (0, 0)),           # W1^T
            pl.BlockSpec((1, D), lambda i: (0, 0)),           # b1
        ],
        out_specs=pl.BlockSpec((TB, D), lambda i: (i, 0)),
        compiler_params=pltpu.CompilerParams(
            dimension_semantics=("parallel",)),
        cost_estimate=cost,
    )(t2d, freq_p, phase_p, w0t_p, b0r, w1t, b1r)

    if Bp != B:
        out = out[:B]
    return out


def time_embedding_ref(t, freqs, w0, b0, w1, b1):
    """Pure-JAX reference mirroring the PyTorch forward (explicit cos/sin concat)."""
    args = t.astype(jnp.float32)[:, None] * freqs[None, :]
    emb = jnp.concatenate([jnp.cos(args), jnp.sin(args)], axis=-1)
    h = emb @ w0.T + b0
    h = h * jax.nn.sigmoid(h)
    return h @ w1.T + b1


if __name__ == "__main__":
    B = 8                 # batch of timesteps
    model_channels = 64   # sinusoidal embedding dim
    time_embed_dim = 128  # output embedding dim

    key = jax.random.PRNGKey(0)
    k_t, k_w0, k_b0, k_w1, k_b1 = jax.random.split(key, 5)

    # Deterministic synthetic parameters.
    w0 = 0.02 * jax.random.normal(k_w0, (time_embed_dim, model_channels), jnp.float32)
    b0 = 0.02 * jax.random.normal(k_b0, (time_embed_dim,), jnp.float32)
    w1 = 0.02 * jax.random.normal(k_w1, (time_embed_dim, time_embed_dim), jnp.float32)
    b1 = 0.02 * jax.random.normal(k_b1, (time_embed_dim,), jnp.float32)

    # Reference frequencies (same convention as the prepared params).
    half = model_channels // 2
    freqs = jnp.exp(-math.log(10000.0) * jnp.arange(half, dtype=jnp.float32) / half)

    # One-time parameter prep (transposes / padding hoisted out of the call path).
    params = prepare_time_embedding_params(model_channels, w0, b0, w1, b1)

    # Main run: B = 8 (already sublane-aligned).
    t = jax.random.randint(k_t, (B,), 0, 1000).astype(jnp.float32)
    out = jax.block_until_ready(time_embedding(t, params))
    ref = time_embedding_ref(t, freqs, w0, b0, w1, b1)
    assert out.shape == (B, time_embed_dim)
    assert jnp.allclose(out, ref, atol=1e-4, rtol=1e-4), "mismatch vs JAX reference"

    # Exercise the B % 8 != 0 padding path (e.g. sampling with B=5).
    t_odd = t[:5]
    out_odd = jax.block_until_ready(time_embedding(t_odd, params))
    ref_odd = time_embedding_ref(t_odd, freqs, w0, b0, w1, b1)
    assert out_odd.shape == (5, time_embed_dim)
    assert jnp.allclose(out_odd, ref_odd, atol=1e-4, rtol=1e-4), "mismatch (padded B)"

    print("KERNEL_OK")
</pallas_src>

<mosaic_0001>
module attributes {stable_mosaic.version = 11 : i64} {
  func.func @time_embedding_kernel(%arg0: i32, %arg1: memref<8x1xf32, #tpu.memory_space<vmem>>, %arg2: memref<1x128xf32, #tpu.memory_space<vmem>>, %arg3: memref<1x128xf32, #tpu.memory_space<vmem>>, %arg4: memref<128x128xf32, #tpu.memory_space<vmem>>, %arg5: memref<1x128xf32, #tpu.memory_space<vmem>>, %arg6: memref<128x128xf32, #tpu.memory_space<vmem>>, %arg7: memref<1x128xf32, #tpu.memory_space<vmem>>, %arg8: memref<8x128xf32, #tpu.memory_space<vmem>>) attributes {dimension_semantics = [#tpu.dimension_semantics<parallel>], iteration_bounds = array<i64: 1>, scalar_prefetch = 0 : i64, scratch_operands = 0 : i64, tpu.core_type = #tpu.core_type<tc>, window_params = [{transform_indices = @transform_0, window_bounds = array<i64: 8, 1>}, {pipeline_mode = #tpu.pipeline_mode<synchronous>, transform_indices = @transform_1, window_bounds = array<i64: 1, 128>}, {pipeline_mode = #tpu.pipeline_mode<synchronous>, transform_indices = @transform_2, window_bounds = array<i64: 1, 128>}, {pipeline_mode = #tpu.pipeline_mode<synchronous>, transform_indices = @transform_3, window_bounds = array<i64: 128, 128>}, {pipeline_mode = #tpu.pipeline_mode<synchronous>, transform_indices = @transform_4, window_bounds = array<i64: 1, 128>}, {pipeline_mode = #tpu.pipeline_mode<synchronous>, transform_indices = @transform_5, window_bounds = array<i64: 128, 128>}, {pipeline_mode = #tpu.pipeline_mode<synchronous>, transform_indices = @transform_6, window_bounds = array<i64: 1, 128>}, {transform_indices = @transform_7, window_bounds = array<i64: 8, 128>}]} {
    %c0 = arith.constant 0 : index
    %c0_0 = arith.constant 0 : index
    %0 = vector.load %arg1[%c0, %c0_0] : memref<8x1xf32, #tpu.memory_space<vmem>>, vector<8x1xf32>
    %c0_1 = arith.constant 0 : index
    %c0_2 = arith.constant 0 : index
    %1 = vector.load %arg2[%c0_1, %c0_2] : memref<1x128xf32, #tpu.memory_space<vmem>>, vector<1x128xf32>
    %2 = vector.broadcast %0 : vector<8x1xf32> to vector<8x128xf32>
    %3 = vector.broadcast %1 : vector<1x128xf32> to vector<8x128xf32>
    %4 = arith.mulf %2, %3 : vector<8x128xf32>
    %c0_3 = arith.constant 0 : index
    %c0_4 = arith.constant 0 : index
    %5 = vector.load %arg3[%c0_3, %c0_4] : memref<1x128xf32, #tpu.memory_space<vmem>>, vector<1x128xf32>
    %6 = vector.broadcast %5 : vector<1x128xf32> to vector<8x128xf32>
    %7 = arith.addf %4, %6 : vector<8x128xf32>
    %8 = math.cos %7 : vector<8x128xf32>
    %c0_5 = arith.constant 0 : index
    %c0_6 = arith.constant 0 : index
    %9 = vector.load %arg4[%c0_5, %c0_6] : memref<128x128xf32, #tpu.memory_space<vmem>>, vector<128x128xf32>
    %cst = arith.constant dense<0.000000e+00> : vector<8x128xf32>
    %10 = tpu.matmul %8, %9, %cst {dimension_numbers = #tpu.dot_dimension_numbers<[1], [0], [0], [1], [0, 0, 1, 1], [], []>} : vector<8x128xf32>, vector<128x128xf32>, vector<8x128xf32> -> vector<8x128xf32>
    %c0_7 = arith.constant 0 : index
    %c0_8 = arith.constant 0 : index
    %11 = vector.load %arg5[%c0_7, %c0_8] : memref<1x128xf32, #tpu.memory_space<vmem>>, vector<1x128xf32>
    %12 = vector.broadcast %11 : vector<1x128xf32> to vector<8x128xf32>
    %13 = arith.addf %10, %12 : vector<8x128xf32>
    %14 = arith.negf %13 : vector<8x128xf32>
    %15 = math.exp %14 : vector<8x128xf32>
    %cst_9 = arith.constant 1.000000e+00 : f32
    %16 = vector.broadcast %cst_9 : f32 to vector<8x128xf32>
    %17 = arith.addf %16, %15 : vector<8x128xf32>
    %18 = arith.divf %16, %17 : vector<8x128xf32>
    %19 = arith.mulf %13, %18 : vector<8x128xf32>
    %c0_10 = arith.constant 0 : index
    %c0_11 = arith.constant 0 : index
    %20 = vector.load %arg6[%c0_10, %c0_11] : memref<128x128xf32, #tpu.memory_space<vmem>>, vector<128x128xf32>
    %cst_12 = arith.constant dense<0.000000e+00> : vector<8x128xf32>
    %21 = tpu.matmul %19, %20, %cst_12 {dimension_numbers = #tpu.dot_dimension_numbers<[1], [0], [0], [1], [0, 0, 1, 1], [], []>} : vector<8x128xf32>, vector<128x128xf32>, vector<8x128xf32> -> vector<8x128xf32>
    %c0_13 = arith.constant 0 : index
    %c0_14 = arith.constant 0 : index
    %22 = vector.load %arg7[%c0_13, %c0_14] : memref<1x128xf32, #tpu.memory_space<vmem>>, vector<1x128xf32>
    %23 = vector.broadcast %22 : vector<1x128xf32> to vector<8x128xf32>
    %24 = arith.addf %21, %23 : vector<8x128xf32>
    %c0_15 = arith.constant 0 : index
    %c0_16 = arith.constant 0 : index
    %25 = vector.load %arg8[%c0_15, %c0_16] : memref<8x128xf32, #tpu.memory_space<vmem>>, vector<8x128xf32>
    tpu.vector_store %arg8[%c0_15, %c0_16], %24 {strides = array<i32>} : memref<8x128xf32, #tpu.memory_space<vmem>>, vector<8x128xf32>,
    return
  }
  func.func @transform_0(%arg0: i32) -> (i32, i32) {
    %c0_i32 = arith.constant 0 : i32
    %c0_i32_0 = arith.constant 0 : i32
    return %arg0, %c0_i32 : i32, i32
  }
  func.func @transform_1(%arg0: i32) -> (i32, i32) {
    %c0_i32 = arith.constant 0 : i32
    %c0_i32_0 = arith.constant 0 : i32
    %c0_i32_1 = arith.constant 0 : i32
    return %c0_i32, %c0_i32_0 : i32, i32
  }
  func.func @transform_2(%arg0: i32) -> (i32, i32) {
    %c0_i32 = arith.constant 0 : i32
    %c0_i32_0 = arith.constant 0 : i32
    %c0_i32_1 = arith.constant 0 : i32
    return %c0_i32, %c0_i32_0 : i32, i32
  }
  func.func @transform_3(%arg0: i32) -> (i32, i32) {
    %c0_i32 = arith.constant 0 : i32
    %c0_i32_0 = arith.constant 0 : i32
    %c0_i32_1 = arith.constant 0 : i32
    return %c0_i32, %c0_i32_0 : i32, i32
  }
  func.func @transform_4(%arg0: i32) -> (i32, i32) {
    %c0_i32 = arith.constant 0 : i32
    %c0_i32_0 = arith.constant 0 : i32
    %c0_i32_1 = arith.constant 0 : i32
    return %c0_i32, %c0_i32_0 : i32, i32
  }
  func.func @transform_5(%arg0: i32) -> (i32, i32) {
    %c0_i32 = arith.constant 0 : i32
    %c0_i32_0 = arith.constant 0 : i32
    %c0_i32_1 = arith.constant 0 : i32
    return %c0_i32, %c0_i32_0 : i32, i32
  }
  func.func @transform_6(%arg0: i32) -> (i32, i32) {
    %c0_i32 = arith.constant 0 : i32
    %c0_i32_0 = arith.constant 0 : i32
    %c0_i32_1 = arith.constant 0 : i32
    return %c0_i32, %c0_i32_0 : i32, i32
  }
  func.func @transform_7(%arg0: i32) -> (i32, i32) {
    %c0_i32 = arith.constant 0 : i32
    %c0_i32_0 = arith.constant 0 : i32
    return %arg0, %c0_i32 : i32, i32
  }
}

</mosaic_0001>

<llo_original>
// kernel: tpu_custom_call.1
$region0: #{tpu_custom_call.1}
  #allocation0 [shape = 'u32[]', space=smem, size = 0x4, offset = 0x4, fixed_abs, tag = 'smem constant byte address 0x4 - core index']
  #allocation1 [shape = 'u32[72,128]{1,0:T(1,128)}', space=vmem, size = 0x9000, scoped, tag = 'internal scratch']
  %s0 = inlined_call_operand.vmem [shape: f32[8,1], index: 0, kind: input, shape index: {}]
  %s1 = inlined_call_operand.vmem [shape: f32[1,128], index: 1, kind: input, shape index: {}]
  %s2 = inlined_call_operand.vmem [shape: f32[1,128], index: 2, kind: input, shape index: {}]
  %s3 = inlined_call_operand.hbm [shape: f32[128,128], index: 3, kind: input, shape index: {}]
  %s4 = inlined_call_operand.vmem [shape: f32[1,128], index: 4, kind: input, shape index: {}]
  %s5 = inlined_call_operand.hbm [shape: f32[128,128], index: 5, kind: input, shape index: {}]
  %s6 = inlined_call_operand.vmem [shape: f32[1,128], index: 6, kind: input, shape index: {}]
  %s7 = inlined_call_operand.hbm [shape: f32[8,128], index: 7, kind: output, shape index: {}]
  %s8 = sld [smem:[#allocation0]]
  $region46: #{tpu_custom_call.1} parent=0
    _
  %s10 = ssub.s32 1, %s8
  %s11 = scalar_select 0, %s10, %s8
  $region1: #{tpu_custom_call.1} parent=0
    #allocation2 [shape = 'u8[65536]{0}', space=vmem, size = 0x10000, scoped, tag = 'input window, operand 3, single buffered']
    #allocation3 [shape = 's32[1]{0}', space=sflag, size = 0x4, scoped, tag = 'scoped memory for tpu_custom_call.1']
    #allocation4 [shape = 's32[1]{0}', space=sflag, size = 0x4, scoped, tag = 'scoped memory for tpu_custom_call.1']
    #allocation5 [shape = 'u8[65536]{0}', space=vmem, size = 0x10000, scoped, tag = 'input window, operand 5, single buffered']
    #allocation6 [shape = 's32[1]{0}', space=sflag, size = 0x4, scoped, tag = 'scoped memory for tpu_custom_call.1']
    #allocation7 [shape = 'u8[4096]{0}', space=vmem, size = 0x1000, scoped, tag = 'output window, operand 0, single buffered']
    %12 = vsyncpa [#allocation3], 0
    %13 = vsyncpa [#allocation6], 0
    %14 = vsyncpa [#allocation4], 0
    // Predicated region
    $region2: #{tpu_custom_call.1} parent=1 // pred_check
      _
    $region3: #{tpu_custom_call.1} parent=1 // pred_check_branch
      %16 = sbr.rel (0) target = $region5
    $region4: #{tpu_custom_call.1} parent=1 // pred_region
      _
    $region5: #{tpu_custom_call.1} parent=1 // pred_fallthru
      _
    // Predicated region
    $region6: #{tpu_custom_call.1} parent=1 // pred_check
      _
    $region7: #{tpu_custom_call.1} parent=1 // pred_check_branch
      %18 = sbr.rel (0) target = $region9
    $region8: #{tpu_custom_call.1} parent=1 // pred_region
      _
    $region9: #{tpu_custom_call.1} parent=1 // pred_fallthru
      _
    // Predicated region
    $region10: #{tpu_custom_call.1} parent=1 // pred_check
      _
    $region11: #{tpu_custom_call.1} parent=1 // pred_check_branch
      %20 = sbr.rel (0) target = $region13
    $region12: #{tpu_custom_call.1} parent=1 // pred_region
      _
    $region13: #{tpu_custom_call.1} parent=1 // pred_fallthru
      _
    // Predicated region
    $region14: #{tpu_custom_call.1} parent=1 // pred_check
      _
    $region15: #{tpu_custom_call.1} parent=1 // pred_check_branch
      %22 = sbr.rel (0) target = $region17
    $region16: #{tpu_custom_call.1} parent=1 // pred_region
      %24 = vsyncadd [#allocation3], 0
      %s25 = sshll.u32 %s3, 4
      %s26 = int_to_ptr.hbm [resolvable:$true] %s25
      %s27 = sshll.u32 [#allocation2], 4
      %s28 = int_to_ptr.vmem [resolvable:$true] %s27
      %33 = dma.hbm_to_vmem [thread:$0]  %s26, 2048, %s28, [#allocation3], 128, 128, 8
    $region17: #{tpu_custom_call.1} parent=1 // pred_fallthru
      _
    // Predicated region
    $region18: #{tpu_custom_call.1} parent=1 // pred_check
      _
    $region19: #{tpu_custom_call.1} parent=1 // pred_check_branch
      %35 = sbr.rel (0) target = $region21
    $region20: #{tpu_custom_call.1} parent=1 // pred_region
      _
    $region21: #{tpu_custom_call.1} parent=1 // pred_fallthru
      _
    // Predicated region
    $region22: #{tpu_custom_call.1} parent=1 // pred_check
      _
    $region23: #{tpu_custom_call.1} parent=1 // pred_check_branch
      %37 = sbr.rel (0) target = $region25
    $region24: #{tpu_custom_call.1} parent=1 // pred_region
      %39 = vsyncadd [#allocation6], 0
      %s40 = sshll.u32 %s5, 4
      %s41 = int_to_ptr.hbm [resolvable:$true] %s40
      %s42 = sshll.u32 [#allocation5], 4
      %s43 = int_to_ptr.vmem [resolvable:$true] %s42
      %48 = dma.hbm_to_vmem [thread:$0]  %s41, 2048, %s43, [#allocation6], 128, 128, 8
    $region25: #{tpu_custom_call.1} parent=1 // pred_fallthru
      _
    // Predicated region
    $region26: #{tpu_custom_call.1} parent=1 // pred_check
      _
    $region27: #{tpu_custom_call.1} parent=1 // pred_check_branch
      %50 = sbr.rel (0) target = $region29
    $region28: #{tpu_custom_call.1} parent=1 // pred_region
      _
    $region29: #{tpu_custom_call.1} parent=1 // pred_fallthru
      _
    // Predicated region
    $region30: #{tpu_custom_call.1} parent=1 // pred_check
      _
    $region31: #{tpu_custom_call.1} parent=1 // pred_check_branch
      %52 = sbr.rel (0) target = $region33
    $region32: #{tpu_custom_call.1} parent=1 // pred_region
      %54 = dma.done [#allocation3], 2048
    $region33: #{tpu_custom_call.1} parent=1 // pred_fallthru
      _
    // Predicated region
    $region34: #{tpu_custom_call.1} parent=1 // pred_check
      _
    $region35: #{tpu_custom_call.1} parent=1 // pred_check_branch
      %56 = sbr.rel (0) target = $region37
    $region36: #{tpu_custom_call.1} parent=1 // pred_region
      %58 = dma.done [#allocation6], 2048
    $region37: #{tpu_custom_call.1} parent=1 // pred_fallthru
      _
    %v59 = vld [vmem:[%s0] sm:$0xff]
    %v60 = vld [vmem:[%s1] sm:$0x1]
    %62 = vset.pattern.permute.xlu0 0
    %63 = vperm.xlu0 %62, %v59
    %v64 = vpop.permute.xlu0 %63
    %v67 = vperm.slane %v60, 0
    %v69 = vmul.f32 %v64, %v67
    %v70 = vld [vmem:[%s2] sm:$0x1]
    %v72 = vperm.slane %v70, 0
    %v74 = vadd.f32 %v69, %v72
    %v75 = vand.u32 2147483647, %v74
    %vm76 = vcmp.le.f32.partialorder %v75, 0.7853982
    %vm77 = vcmp.lt.s32.totalorder %v74, 0
    %v78 = vand.u32 %v74, 2139095040
    %v79 = vshrl.u32 %v78, 23
    %v80 = vsub.s32 %v79, 127
    %v81 = vand.u32 2147483647, %v74
    %v82 = vand.u32 %v81, 8388607
    %v83 = vor.u32 %v82, 8388608
    %v84 = vsub.s32 0, %v83
    %v85 = vadd.s32 %v80, 1
    %vm86 = vcmp.gt.s32.totalorder %v85, 0
    %v87 = vsel %vm86, %v85, 0
    %v88 = vshrl.u32 %v87, 5
    %v89 = vand.u32 %v87, 31
    %v90 = vsub.s32 32, %v89
    %v91 = vshrl.u32 683565275, %v90
    %v92 = vshll.u32 683565275, %v89
    %v93 = vshrl.u32 2475754826, %v90
    %v94 = vor.u32 %v92, %v93
    %v95 = vshll.u32 2475754826, %v89
    %v96 = vshrl.u32 2131351028, %v90
    %v97 = vor.u32 %v95, %v96
    %v98 = vshll.u32 2131351028, %v89
    %v99 = vshrl.u32 2102212464, %v90
    %v100 = vor.u32 %v98, %v99
    %v101 = vshll.u32 2102212464, %v89
    %v102 = vshrl.u32 920167782, %v90
    %v103 = vor.u32 %v101, %v102
    %v104 = vshll.u32 920167782, %v89
    %v105 = vshrl.u32 1326507024, %v90
    %v106 = vor.u32 %v104, %v105
    %vm107 = vcmp.lt.s32.totalorder %v88, 1
    %vm108 = vcmp.lt.s32.totalorder %v88, 2
    %vm109 = vcmp.lt.s32.totalorder %v88, 3
    %vm110 = vcmp.lt.s32.totalorder %v88, 4
    %v111 = vsel %vm107, %v91, %v94
    %v112 = vsel %vm110, %v100, 2102212464
    %v113 = vsel %vm109, %v97, %v112
    %v114 = vsel %vm108, %v111, %v113
    %v115 = vsel %vm107, %v94, %v97
    %v116 = vsel %vm110, %v103, 920167782
    %v117 = vsel %vm109, %v100, %v116
    %v118 = vsel %vm108, %v115, %v117
    %v119 = vsel %vm107, %v97, %v100
    %v120 = vsel %vm110, %v106, 1326507024
    %v121 = vsel %vm109, %v103, %v120
    %v122 = vsel %vm108, %v119, %v121
    %v123 = vshll.u32 %v83, 8
    %v124 = vand.u32 %v123, 65535
    %v125 = vshrl.u32 %v123, 16
    %v126 = vand.u32 %v122, 65535
    %v127 = vshrl.u32 %v122, 16
    %v128 = vmul.u32 %v124, %v126
    %v129 = vmul.u32 %v124, %v127
    %v130 = vmul.u32 %v125, %v126
    %v131 = vmul.u32 %v125, %v127
    %v132 = vshll.u32 %v129, 16
    %v133 = vshrl.u32 %v129, 16
    %v134 = vshll.u32 %v130, 16
    %v135 = vshrl.u32 %v130, 16
    %vm136 = vc.u32 %v128, %v132
    %v137 = vsel %vm136, 1, 0
    %v138 = vadd.s32 %v128, %v132
    %v139 = vadd.s32 %v131, %v137
    %vm140 = vc.u32 %v138, %v134
    %v141 = vsel %vm140, 1, 0
    %v142 = vadd.s32 %v138, %v134
    %v143 = vadd.s32 %v139, %v141
    %v144 = vadd.s32 %v143, %v133
    %v145 = vadd.s32 %v144, %v135
    %v146 = vand.u32 %v123, 65535
    %v147 = vshrl.u32 %v123, 16
    %v148 = vand.u32 %v118, 65535
    %v149 = vshrl.u32 %v118, 16
    %v150 = vmul.u32 %v146, %v148
    %v151 = vmul.u32 %v146, %v149
    %v152 = vmul.u32 %v147, %v148
    %v153 = vmul.u32 %v147, %v149
    %v154 = vshll.u32 %v151, 16
    %v155 = vshrl.u32 %v151, 16
    %v156 = vshll.u32 %v152, 16
    %v157 = vshrl.u32 %v152, 16
    %vm158 = vc.u32 %v150, %v154
    %v159 = vsel %vm158, 1, 0
    %v160 = vadd.s32 %v150, %v154
    %v161 = vadd.s32 %v153, %v159
    %vm162 = vc.u32 %v160, %v156
    %v163 = vsel %vm162, 1, 0
    %v164 = vadd.s32 %v160, %v156
    %v165 = vadd.s32 %v161, %v163
    %v166 = vadd.s32 %v165, %v155
    %v167 = vadd.s32 %v166, %v157
    %v168 = vmul.u32 %v123, %v114
    %v169 = vadd.s32 %v145, %v164
    %vm170 = vc.u32 %v145, %v164
    %v171 = vadd.s32 %v167, 1
    %v172 = vsel %vm170, %v171, %v167
    %v173 = vadd.s32 %v168, %v172
    %v174 = vadd.s32 %v173, 536870912
    %v175 = vshrl.u32 %v174, 30
    %v176 = vshll.u32 %v175, 30
    %v177 = vsub.s32 %v173, %v176
    %vm178 = vcmp.lt.s32.totalorder %v177, 0
    %v179 = vsub.s32 0, %v177
    %v180 = vsel %vm178, %v179, %v177
    %v181 = vclz %v180
    %v182 = vsub.s32 %v181, 2
    %vm183 = vcmp.gt.s32.totalorder 0, %v182
    %v184 = vsel %vm183, 0, %v182
    %v185 = vsub.s32 32, %v184
    %v186 = vshll.u32 %v177, %v184
    %v187 = vshrl.u32 %v169, %v185
    %v188 = vor.u32 %v186, %v187
    %v189 = vsub.s32 4294967266, %v184
    %v190 = vadd.s32 %v189, 127
    %v191 = vshll.u32 %v190, 23
    %v192 = vor.u32 4788187, %v191
    %v193 = vand.u32 2147483647, %v192
    %v195 = vcvt.s32.f32 %v188
    %v196 = vmul.f32 %v195, %v193
    %v197 = vxor.u32 %v196, 2147483648
    %v198 = vsel %vm77, %v197, %v196
    %v199 = vsub.s32 4, %v175
    %v200 = vsel %vm77, %v199, %v175
    %v201 = vsel %vm76, %v74, %v198
    %v202 = vsel %vm76, 0, %v200
    %v203 = vmul.f32 %v201, %v201
    %v204 = vmul.f32 %v203, -0.001358992
    %v205 = vadd.f32 %v204, 0.041655596
    %v206 = vmul.f32 %v203, %v205
    %v207 = vadd.f32 %v206, -0.4999988
    %v208 = vmul.f32 %v203, %v207
    %v209 = vadd.f32 1.0, %v208
    %v210 = vmul.f32 %v201, %v201
    %v211 = vmul.f32 %v210, -0.00019511016
    %v212 = vadd.f32 %v211, 0.008332121
    %v213 = vmul.f32 %v210, %v212
    %v214 = vadd.f32 %v213, -0.16666654
    %v215 = vmul.f32 %v210, %v214
    %v216 = vadd.f32 %v215, 1.0
    %v217 = vmul.f32 %v216, %v201
    %vm218 = vweird.f32 %v74
    %v219 = vand.u32 %v202, 3
    %vm220 = vcmp.lt.s32.totalorder %v219, 2
    %vm221 = vcmp.eq.s32.totalorder %v219, 0
    %v222 = vxor.u32 %v217, 2147483648
    %v223 = vsel %vm221, %v209, %v222
    %vm224 = vcmp.eq.s32.totalorder %v219, 2
    %v225 = vxor.u32 %v209, 2147483648
    %v226 = vsel %vm224, %v225, %v217
    %v227 = vsel %vm220, %v223, %v226
    %v228 = vsel %vm218, nan, %v227
    %v229 = vld [vmem:[#allocation2] sm:$0xff]
    %v230 = vld [vmem:[#allocation2 + $0x8] sm:$0xff]
    %v231 = vld [vmem:[#allocation2 + $0x10] sm:$0xff]
    %v232 = vld [vmem:[#allocation2 + $0x18] sm:$0xff]
    %v233 = vld [vmem:[#allocation2 + $0x20] sm:$0xff]
    %v234 = vld [vmem:[#allocation2 + $0x28] sm:$0xff]
    %v235 = vld [vmem:[#allocation2 + $0x30] sm:$0xff]
    %v236 = vld [vmem:[#allocation2 + $0x38] sm:$0xff]
    %v237 = vld [vmem:[#allocation2 + $0x40] sm:$0xff]
    %v238 = vld [vmem:[#allocation2 + $0x48] sm:$0xff]
    %v239 = vld [vmem:[#allocation2 + $0x50] sm:$0xff]
    %v240 = vld [vmem:[#allocation2 + $0x58] sm:$0xff]
    %v241 = vld [vmem:[#allocation2 + $0x60] sm:$0xff]
    %v242 = vld [vmem:[#allocation2 + $0x68] sm:$0xff]
    %v243 = vld [vmem:[#allocation2 + $0x70] sm:$0xff]
    %v244 = vld [vmem:[#allocation2 + $0x78] sm:$0xff]
    %v245 = vld [vmem:[%s4] sm:$0x1]
    %v247 = vperm.slane %v245, 0
    %249 = vmatpush.msra.mxu0 %v244
    %250 = vmatpush.msra.mxu0 %v243
    %251 = vmatpush.msra.mxu0 %v242
    %252 = vmatpush.msra.mxu0 %v241
    %253 = vmatpush.msra.mxu0 %v240
    %254 = vmatpush.msra.mxu0 %v239
    %255 = vmatpush.msra.mxu0 %v238
    %256 = vmatpush.msra.mxu0 %v237
    %257 = vmatpush.msra.mxu0 %v236
    %258 = vmatpush.msra.mxu0 %v235
    %259 = vmatpush.msra.mxu0 %v234
    %260 = vmatpush.msra.mxu0 %v233
    %261 = vmatpush.msra.mxu0 %v232
    %262 = vmatpush.msra.mxu0 %v231
    %263 = vmatpush.msra.mxu0 %v230
    %264 = vmatpush.msra.mxu0 %v229
    %265 = vmatmul.f32.gmra.mxu0 %v228
    %v266 = vpop.f32.mrf.mxu0
    %v267 = vadd.f32 %v247, %v266
    %268 = vdwg.mxu0
    %v269 = vxor.u32 %v267, 2147483648
    %v270 = vmul.f32 %v269, 1.442695
    %v271 = vpow.pop %v270
    %v272 = vadd.f32 %v271, 1.0
    %v273 = vrcp.pop %v272
    %v274 = vmul.f32 %v272, %v273
    %v275 = vsub.f32 1.0, %v274
    %v276 = vmul.f32 %v273, %v275
    %v277 = vadd.f32 %v273, %v276
    %vm278 = vweird.f32 %v272
    %vm279 = vweird.f32 %v273
    %vm280 = vmor %vm278, %vm279
    %v281 = vsel %vm280, %v273, %v277
    %v282 = vand.u32 2147483647, %v272
    %vm283 = vcmp.eq.f32.partialorder %v282, 8.507059e+37
    %v284 = vand.u32 %v272, 2147483648
    %v285 = vor.u32 1.1754944e-38, %v284
    %v286 = vsel %vm283, %v285, %v281
    %v287 = vmul.f32 1.0, %v286
    %v288 = vmul.f32 %v267, %v287
    %v289 = vld [vmem:[#allocation5] sm:$0xff]
    %v290 = vld [vmem:[#allocation5 + $0x8] sm:$0xff]
    %v291 = vld [vmem:[#allocation5 + $0x10] sm:$0xff]
    %v292 = vld [vmem:[#allocation5 + $0x18] sm:$0xff]
    %v293 = vld [vmem:[#allocation5 + $0x20] sm:$0xff]
    %v294 = vld [vmem:[#allocation5 + $0x28] sm:$0xff]
    %v295 = vld [vmem:[#allocation5 + $0x30] sm:$0xff]
    %v296 = vld [vmem:[#allocation5 + $0x38] sm:$0xff]
    %v297 = vld [vmem:[#allocation5 + $0x40] sm:$0xff]
    %v298 = vld [vmem:[#allocation5 + $0x48] sm:$0xff]
    %v299 = vld [vmem:[#allocation5 + $0x50] sm:$0xff]
    %v300 = vld [vmem:[#allocation5 + $0x58] sm:$0xff]
    %v301 = vld [vmem:[#allocation5 + $0x60] sm:$0xff]
    %v302 = vld [vmem:[#allocation5 + $0x68] sm:$0xff]
    %v303 = vld [vmem:[#allocation5 + $0x70] sm:$0xff]
    %v304 = vld [vmem:[#allocation5 + $0x78] sm:$0xff]
    %v305 = vld [vmem:[%s6] sm:$0x1]
    %v307 = vperm.slane %v305, 0
    %309 = vmatpush.msra.mxu0 %v304
    %310 = vmatpush.msra.mxu0 %v303
    %311 = vmatpush.msra.mxu0 %v302
    %312 = vmatpush.msra.mxu0 %v301
    %313 = vmatpush.msra.mxu0 %v300
    %314 = vmatpush.msra.mxu0 %v299
    %315 = vmatpush.msra.mxu0 %v298
    %316 = vmatpush.msra.mxu0 %v297
    %317 = vmatpush.msra.mxu0 %v296
    %318 = vmatpush.msra.mxu0 %v295
    %319 = vmatpush.msra.mxu0 %v294
    %320 = vmatpush.msra.mxu0 %v293
    %321 = vmatpush.msra.mxu0 %v292
    %322 = vmatpush.msra.mxu0 %v291
    %323 = vmatpush.msra.mxu0 %v290
    %324 = vmatpush.msra.mxu0 %v289
    %325 = vmatmul.f32.gmra.mxu0 %v288
    %v326 = vpop.f32.mrf.mxu0
    %v327 = vadd.f32 %v307, %v326
    %328 = vdwg.mxu0
    %329 = vst [vmem:[#allocation7] sm:$0xff] %v327
    // Predicated region
    $region38: #{tpu_custom_call.1} parent=1 // pred_check
      _
    $region39: #{tpu_custom_call.1} parent=1 // pred_check_branch
      %331 = sbr.rel (0) target = $region41
    $region40: #{tpu_custom_call.1} parent=1 // pred_region
      %333 = vsyncadd [#allocation4], 0
      %s335 = sshll.u32 [#allocation7], 4
      %s336 = int_to_ptr.vmem [resolvable:$true] %s335
      %s337 = sshll.u32 %s7, 4
      %s338 = int_to_ptr.hbm [resolvable:$true] %s337
      %340 = dma.vmem_to_hbm [thread:$0]  %s336, 128, %s338, [#allocation4]
    $region41: #{tpu_custom_call.1} parent=1 // pred_fallthru
      _
    // Predicated region
    $region42: #{tpu_custom_call.1} parent=1 // pred_check
      _
    $region43: #{tpu_custom_call.1} parent=1 // pred_check_branch
      %342 = sbr.rel (0) target = $region45
    $region44: #{tpu_custom_call.1} parent=1 // pred_region
      %344 = dma.done [#allocation4], 128
    $region45: #{tpu_custom_call.1} parent=1 // pred_fallthru
      _
    %345 = vsyncpa [#allocation3], 1
    %346 = vsyncpa [#allocation6], 1
    %347 = vsyncpa [#allocation4], 1

</llo_original>
